<compile_context>
chip_gen: v7x
topology: tpu7x:2x2x1
jax: 0.10.0
libtpu: 0.0.40
codegen_flags: <defaults>
</compile_context>

<pallas_src>
import functools

import jax
import jax.numpy as jnp
from jax import lax
from jax.experimental import pallas as pl
from jax.experimental.pallas import tpu as pltpu


_NEG_SENTINEL = -1e30  # fill value for feature-dim padding (fails support test)


def _sparsemax_kernel(x_ref, o_ref, *, d_valid, d_padded, d_chunk):
    """Processes one (row_tile, d_padded) block; rows are independent."""
    x = x_ref[...].astype(jnp.float32)                              # (T, Dp)

    # s[b, i] = sum_j relu(x[b, j] - x[b, i]); j streamed in chunks so the
    # (T, Dp, Jc) broadcast slab (not (T, Dp, Dp)) bounds live VMEM.
    def chunk_sum(j_start, width):
        xj = x_ref[:, pl.ds(j_start, width)].astype(jnp.float32)    # (T, Jc)
        diff = xj[:, None, :] - x[:, :, None]                       # (T, Dp, Jc)
        return jnp.sum(jnp.maximum(diff, 0.0), axis=-1)             # (T, Dp)

    n_full = d_padded // d_chunk
    rem = d_padded - n_full * d_chunk

    if n_full == 1 and rem == 0:
        s = chunk_sum(0, d_chunk)
    else:
        def body(c, acc):
            j0 = pl.multiple_of(c * d_chunk, d_chunk)
            return acc + chunk_sum(j0, d_chunk)

        s = lax.fori_loop(0, n_full, body,
                          jnp.zeros(x.shape, jnp.float32),
                          unroll=(n_full <= 8))
        if rem:
            s = s + chunk_sum(n_full * d_chunk, rem)

    supp = (s < 1.0).astype(jnp.float32)                            # (T, Dp)

    if d_padded != d_valid:
        # Pad lanes hold the large-negative sentinel so s_pad >> 1 already
        # fails the support test; mask explicitly anyway for robustness.
        lane = lax.broadcasted_iota(jnp.int32, supp.shape, dimension=1)
        supp = jnp.where(lane < d_valid, supp, 0.0)

    rho = jnp.sum(supp, axis=-1, keepdims=True)                     # (T, 1) >= 1
    ssum = jnp.sum(x * supp, axis=-1, keepdims=True)                # (T, 1)
    tau = (ssum - 1.0) * pl.reciprocal(rho, approx=False)           # exact

    o_ref[...] = jnp.maximum(x - tau, 0.0).astype(o_ref.dtype)


def _round_up(v, m):
    return ((v + m - 1) // m) * m


def _choose_layout(batch, d, dtype):
    """Pick (row_tile, padded_D, j_chunk) from a VMEM budget."""
    itemsize = jnp.dtype(dtype).itemsize
    sub = 8 if itemsize >= 4 else (16 if itemsize == 2 else 32)

    # Lane-dense feature padding only when the sublane rows it adds to the
    # O(D^2) pairwise pass are small (<~12.5%); never at tiny D (e.g. 32).
    dp = d
    if d % 128 != 0:
        cand = _round_up(d, 128)
        if cand <= 1.125 * _round_up(d, 8):
            dp = cand

    # j-chunk width: whole row if it fits, else 512 lanes per chunk.
    jc = dp if dp <= 512 else 512

    # Row tile sized so ~2 live (T, Dp, Jc) f32 slabs stay near 16 MiB total
    # (well inside v7x's 64 MiB VMEM including double-buffered in/out tiles).
    budget = 8 * 1024 * 1024
    per_row = dp * jc * 4 + 8 * dp * 4
    t = max(sub, (budget // per_row) // sub * sub)
    t = min(t, 256)
    t = min(t, _round_up(batch, sub))
    return int(t), int(dp), int(jc)


def sparsemax(x):
    """SparseMax over dim=1 for a 2-D (batch, features) input."""
    B, D = x.shape
    T, Dp, Jc = _choose_layout(B, D, x.dtype)

    xp = x
    if Dp != D:
        xp = jnp.pad(x, ((0, 0), (0, Dp - D)), constant_values=_NEG_SENTINEL)

    n_tiles = pl.cdiv(B, T)
    itemsize = jnp.dtype(x.dtype).itemsize

    kernel = functools.partial(
        _sparsemax_kernel, d_valid=D, d_padded=Dp, d_chunk=Jc)

    # Scoped-VMEM request: ~2 live chunk slabs + double-buffered in/out tiles
    # + headroom; clamped to a level that is safe on every generation
    # (>= v5e's 16 MiB default, < v7x's 64 MiB physical).
    need = 2 * T * Dp * Jc * 4 + 4 * T * Dp * (4 + itemsize) + (4 << 20)
    vmem_limit = int(min(max(need, 32 << 20), 48 << 20))

    cost = pl.CostEstimate(
        flops=int(3 * B * Dp * Dp + 8 * B * Dp),
        transcendentals=int(B),
        bytes_accessed=int(2 * B * Dp * itemsize),
    )

    out = pl.pallas_call(
        kernel,
        out_shape=jax.ShapeDtypeStruct((B, Dp), x.dtype),
        grid_spec=pltpu.PrefetchScalarGridSpec(
            num_scalar_prefetch=0,
            grid=(n_tiles,),
            in_specs=[pl.BlockSpec((T, Dp), lambda i: (i, 0))],
            out_specs=pl.BlockSpec((T, Dp), lambda i: (i, 0)),
        ),
        compiler_params=pltpu.CompilerParams(
            dimension_semantics=("parallel",),
            vmem_limit_bytes=vmem_limit,
        ),
        cost_estimate=cost,
    )(xp)

    return out[:, :D] if Dp != D else out


def _sparsemax_reference(x):
    """Pure-JAX mirror of the PyTorch forward (sort-based)."""
    sorted_x = -jnp.sort(-x, axis=1)                       # descending sort
    cum = jnp.cumsum(sorted_x, axis=1)
    k = jnp.arange(1, x.shape[1] + 1, dtype=x.dtype)[None, :]
    thr_vals = (cum - 1.0) / k
    rho = jnp.sum((sorted_x > thr_vals).astype(jnp.int32), axis=1)
    idx = jnp.maximum(rho - 1, 0)
    thr = jnp.take_along_axis(thr_vals, idx[:, None], axis=1)
    return jnp.maximum(x - thr, jnp.zeros_like(x))


if __name__ == "__main__":
    key = jax.random.PRNGKey(0)
    # 2-D input (batch, features), as implied by the module's dim=1 reduction
    # and threshold_values[arange(B), ...] indexing.
    x = jax.random.normal(key, (8, 32), dtype=jnp.float32)

    out = jax.block_until_ready(sparsemax(x))

    ref = _sparsemax_reference(x)
    assert out.shape == x.shape and out.dtype == x.dtype
    assert jnp.allclose(out, ref, atol=1e-5, rtol=1e-5)
    # Sanity: sparsemax outputs lie on the simplex (non-negative, rows sum to 1).
    assert jnp.allclose(jnp.sum(out, axis=1), 1.0, atol=1e-5)
    assert bool(jnp.all(out >= 0.0))

    print("KERNEL_OK")
</pallas_src>

<mosaic_0001>
module attributes {stable_mosaic.version = 11 : i64} {
  func.func @_sparsemax_kernel(%arg0: i32, %arg1: memref<8x32xf32, #tpu.memory_space<vmem>>, %arg2: memref<8x32xf32, #tpu.memory_space<vmem>>) attributes {dimension_semantics = [#tpu.dimension_semantics<parallel>], iteration_bounds = array<i64: 1>, scalar_prefetch = 0 : i64, scratch_operands = 0 : i64, tpu.core_type = #tpu.core_type<tc>, window_params = [{transform_indices = @transform_0, window_bounds = array<i64: 8, 32>}, {transform_indices = @transform_1, window_bounds = array<i64: 8, 32>}]} {
    %c0 = arith.constant 0 : index
    %c0_0 = arith.constant 0 : index
    %0 = vector.load %arg1[%c0, %c0_0] : memref<8x32xf32, #tpu.memory_space<vmem>>, vector<8x32xf32>
    %c0_1 = arith.constant 0 : index
    %c0_2 = arith.constant 0 : index
    %1 = vector.load %arg1[%c0_1, %c0_2] : memref<8x32xf32, #tpu.memory_space<vmem>>, vector<8x32xf32>
    %2 = vector.shape_cast %1 : vector<8x32xf32> to vector<8x1x32xf32>
    %3 = vector.shape_cast %0 : vector<8x32xf32> to vector<8x32x1xf32>
    %4 = vector.broadcast %2 : vector<8x1x32xf32> to vector<8x32x32xf32>
    %5 = vector.broadcast %3 : vector<8x32x1xf32> to vector<8x32x32xf32>
    %6 = arith.subf %4, %5 : vector<8x32x32xf32>
    %cst = arith.constant 0.000000e+00 : f32
    %7 = vector.broadcast %cst : f32 to vector<8x32x32xf32>
    %8 = arith.maximumf %6, %7 : vector<8x32x32xf32>
    %cst_3 = arith.constant dense<0.000000e+00> : vector<8x32xf32>
    %9 = vector.multi_reduction <add>, %8, %cst_3 [2] : vector<8x32x32xf32> to vector<8x32xf32>
    %cst_4 = arith.constant 1.000000e+00 : f32
    %10 = vector.broadcast %cst_4 : f32 to vector<8x32xf32>
    %11 = arith.cmpf olt, %9, %10 : vector<8x32xf32>
    %12 = arith.extui %11 : vector<8x32xi1> to vector<8x32xi32>
    %13 = arith.sitofp %12 : vector<8x32xi32> to vector<8x32xf32>
    %cst_5 = arith.constant dense<0.000000e+00> : vector<8xf32>
    %14 = vector.multi_reduction <add>, %13, %cst_5 [1] : vector<8x32xf32> to vector<8xf32>
    %15 = vector.shape_cast %14 : vector<8xf32> to vector<8x1xf32>
    %16 = arith.mulf %0, %13 : vector<8x32xf32>
    %cst_6 = arith.constant dense<0.000000e+00> : vector<8xf32>
    %17 = vector.multi_reduction <add>, %16, %cst_6 [1] : vector<8x32xf32> to vector<8xf32>
    %18 = vector.shape_cast %17 : vector<8xf32> to vector<8x1xf32>
    %cst_7 = arith.constant 1.000000e+00 : f32
    %19 = vector.broadcast %cst_7 : f32 to vector<8x1xf32>
    %20 = arith.subf %18, %19 : vector<8x1xf32>
    %21 = tpu.reciprocal %15 : vector<8x1xf32> -> vector<8x1xf32>
    %22 = arith.mulf %20, %21 : vector<8x1xf32>
    %23 = vector.broadcast %22 : vector<8x1xf32> to vector<8x32xf32>
    %24 = arith.subf %0, %23 : vector<8x32xf32>
    %cst_8 = arith.constant 0.000000e+00 : f32
    %25 = vector.broadcast %cst_8 : f32 to vector<8x32xf32>
    %26 = arith.maximumf %24, %25 : vector<8x32xf32>
    %c0_9 = arith.constant 0 : index
    %c0_10 = arith.constant 0 : index
    %27 = vector.load %arg2[%c0_9, %c0_10] : memref<8x32xf32, #tpu.memory_space<vmem>>, vector<8x32xf32>
    tpu.vector_store %arg2[%c0_9, %c0_10], %26 {strides = array<i32>} : memref<8x32xf32, #tpu.memory_space<vmem>>, vector<8x32xf32>,
    return
  }
  func.func @transform_0(%arg0: i32) -> (i32, i32) {
    %c0_i32 = arith.constant 0 : i32
    %c0_i32_0 = arith.constant 0 : i32
    return %arg0, %c0_i32 : i32, i32
  }
  func.func @transform_1(%arg0: i32) -> (i32, i32) {
    %c0_i32 = arith.constant 0 : i32
    %c0_i32_0 = arith.constant 0 : i32
    return %arg0, %c0_i32 : i32, i32
  }
}

</mosaic_0001>

<llo_original>
// kernel: tpu_custom_call.1
$region0: #{tpu_custom_call.1}
  #allocation0 [shape = 'u32[]', space=smem, size = 0x4, offset = 0x4, fixed_abs, tag = 'smem constant byte address 0x4 - core index']
  #allocation1 [shape = 'u32[144,128]{1,0:T(1,128)}', space=vmem, size = 0x12000, scoped, tag = 'internal scratch']
  %s0 = inlined_call_operand.hbm [shape: f32[8,32], index: 0, kind: input, shape index: {}]
  %s1 = inlined_call_operand.hbm [shape: f32[8,32], index: 1, kind: output, shape index: {}]
  %s2 = sld [smem:[#allocation0]]
  $region18: #{tpu_custom_call.1} parent=0
    _
  %s4 = ssub.s32 1, %s2
  %s5 = scalar_select 0, %s4, %s2
  $region1: #{tpu_custom_call.1} parent=0
    #allocation2 [shape = 'u8[4096]{0}', space=vmem, size = 0x1000, scoped, tag = 'input window, operand 0, single buffered']
    #allocation3 [shape = 's32[1]{0}', space=sflag, size = 0x4, scoped, tag = 'scoped memory for tpu_custom_call.1']
    #allocation4 [shape = 's32[1]{0}', space=sflag, size = 0x4, scoped, tag = 'scoped memory for tpu_custom_call.1']
    #allocation5 [shape = 'u8[4096]{0}', space=vmem, size = 0x1000, scoped, tag = 'output window, operand 0, single buffered']
    %6 = vsyncpa [#allocation3], 0
    %7 = vsyncpa [#allocation4], 0
    // Predicated region
    $region2: #{tpu_custom_call.1} parent=1 // pred_check
      _
    $region3: #{tpu_custom_call.1} parent=1 // pred_check_branch
      %9 = sbr.rel (0) target = $region5
    $region4: #{tpu_custom_call.1} parent=1 // pred_region
      %s11 = ssub.s32 128, 128
      %12 = vsyncadd [#allocation3], %s11
      %s14 = sshll.u32 [#allocation2], 4
      %s15 = int_to_ptr.vmem [resolvable:$true] %s14
      %17 = dma.hbm_to_vmem [thread:$0]  %s0, 128, %s15, [#allocation3]
    $region5: #{tpu_custom_call.1} parent=1 // pred_fallthru
      _
    // Predicated region
    $region6: #{tpu_custom_call.1} parent=1 // pred_check
      _
    $region7: #{tpu_custom_call.1} parent=1 // pred_check_branch
      %19 = sbr.rel (0) target = $region9
    $region8: #{tpu_custom_call.1} parent=1 // pred_region
      %20 = dma.done [#allocation3], 128
    $region9: #{tpu_custom_call.1} parent=1 // pred_fallthru
      _
    %v21 = vld [vmem:[#allocation2] sm:$0xff]
    %v23 = vcombine.high %v21, %v21
    %v25 = vunpack.c.l.s4 1966171168
    %v26 = vunpack.c.0.s8 %v25
    %v27 = vlaneseq
    %v28 = vshrl.u32 %v27, 7
    %v29 = vsub.s32 %v26, %v28
    %v30 = vrot.slane %v21, %v29
    %v32 = vunpack.c.l.s4 1966171168
    %v33 = vunpack.c.0.s8 %v32
    %v34 = vlaneseq
    %v35 = vshrl.u32 %v34, 7
    %v36 = vsub.s32 %v33, %v35
    %v37 = vrot.slane %v23, %v36
    %v38 = vcombine.high %v30, %v30
    %v39 = vcombine.high %v37, %v37
    %v41 = vunpack.c.l.s4 1966171168
    %v42 = vunpack.c.0.s8 %v41
    %v43 = vlaneseq
    %v44 = vshrl.u32 %v43, 7
    %v45 = vsub.s32 %v42, %v44
    %v46 = vrot.slane %v30, %v45
    %v48 = vunpack.c.l.s4 1966171168
    %v49 = vunpack.c.0.s8 %v48
    %v50 = vlaneseq
    %v51 = vshrl.u32 %v50, 7
    %v52 = vsub.s32 %v49, %v51
    %v53 = vrot.slane %v37, %v52
    %v55 = vunpack.c.l.s4 1966171168
    %v56 = vunpack.c.0.s8 %v55
    %v57 = vlaneseq
    %v58 = vshrl.u32 %v57, 7
    %v59 = vsub.s32 %v56, %v58
    %v60 = vrot.slane %v38, %v59
    %v62 = vunpack.c.l.s4 1966171168
    %v63 = vunpack.c.0.s8 %v62
    %v64 = vlaneseq
    %v65 = vshrl.u32 %v64, 7
    %v66 = vsub.s32 %v63, %v65
    %v67 = vrot.slane %v39, %v66
    %v68 = vcombine.high %v46, %v46
    %v69 = vcombine.high %v53, %v53
    %v70 = vcombine.high %v60, %v60
    %v71 = vcombine.high %v67, %v67
    %v72 = vlaneseq
    %v73 = vshrl.u32 %v72, 7
    %v74 = vsub.s32 0, %v73
    %v75 = vrot.slane %v21, %v74
    %77 = vbcast.lane.b32.xlu0 %v75, 256
    %v78 = vpop.permute.xlu0 %77
    %s80 = sor.u32 256, 8
    %81 = vbcast.lane.b32.xlu0 %v75, %s80
    %v82 = vpop.permute.xlu0 %81
    %s84 = sor.u32 256, 16
    %85 = vbcast.lane.b32.xlu0 %v75, %s84
    %v86 = vpop.permute.xlu0 %85
    %s88 = sor.u32 256, 24
    %89 = vbcast.lane.b32.xlu0 %v75, %s88
    %v90 = vpop.permute.xlu0 %89
    %v91 = vlaneseq
    %v92 = vshrl.u32 %v91, 7
    %v93 = vsub.s32 1, %v92
    %v94 = vrot.slane %v21, %v93
    %96 = vbcast.lane.b32.xlu0 %v94, 256
    %v97 = vpop.permute.xlu0 %96
    %s99 = sor.u32 256, 8
    %100 = vbcast.lane.b32.xlu0 %v94, %s99
    %v101 = vpop.permute.xlu0 %100
    %s103 = sor.u32 256, 16
    %104 = vbcast.lane.b32.xlu0 %v94, %s103
    %v105 = vpop.permute.xlu0 %104
    %s107 = sor.u32 256, 24
    %108 = vbcast.lane.b32.xlu0 %v94, %s107
    %v109 = vpop.permute.xlu0 %108
    %v110 = vlaneseq
    %v111 = vshrl.u32 %v110, 7
    %v112 = vsub.s32 2, %v111
    %v113 = vrot.slane %v21, %v112
    %115 = vbcast.lane.b32.xlu0 %v113, 256
    %v116 = vpop.permute.xlu0 %115
    %s118 = sor.u32 256, 8
    %119 = vbcast.lane.b32.xlu0 %v113, %s118
    %v120 = vpop.permute.xlu0 %119
    %s122 = sor.u32 256, 16
    %123 = vbcast.lane.b32.xlu0 %v113, %s122
    %v124 = vpop.permute.xlu0 %123
    %s126 = sor.u32 256, 24
    %127 = vbcast.lane.b32.xlu0 %v113, %s126
    %v128 = vpop.permute.xlu0 %127
    %v129 = vlaneseq
    %v130 = vshrl.u32 %v129, 7
    %v131 = vsub.s32 3, %v130
    %v132 = vrot.slane %v21, %v131
    %134 = vbcast.lane.b32.xlu0 %v132, 256
    %v135 = vpop.permute.xlu0 %134
    %s137 = sor.u32 256, 8
    %138 = vbcast.lane.b32.xlu0 %v132, %s137
    %v139 = vpop.permute.xlu0 %138
    %s141 = sor.u32 256, 16
    %142 = vbcast.lane.b32.xlu0 %v132, %s141
    %v143 = vpop.permute.xlu0 %142
    %s145 = sor.u32 256, 24
    %146 = vbcast.lane.b32.xlu0 %v132, %s145
    %v147 = vpop.permute.xlu0 %146
    %v148 = vlaneseq
    %v149 = vshrl.u32 %v148, 7
    %v150 = vsub.s32 4, %v149
    %v151 = vrot.slane %v21, %v150
    %153 = vbcast.lane.b32.xlu0 %v151, 256
    %v154 = vpop.permute.xlu0 %153
    %s156 = sor.u32 256, 8
    %157 = vbcast.lane.b32.xlu0 %v151, %s156
    %v158 = vpop.permute.xlu0 %157
    %s160 = sor.u32 256, 16
    %161 = vbcast.lane.b32.xlu0 %v151, %s160
    %v162 = vpop.permute.xlu0 %161
    %s164 = sor.u32 256, 24
    %165 = vbcast.lane.b32.xlu0 %v151, %s164
    %v166 = vpop.permute.xlu0 %165
    %v167 = vlaneseq
    %v168 = vshrl.u32 %v167, 7
    %v169 = vsub.s32 5, %v168
    %v170 = vrot.slane %v21, %v169
    %172 = vbcast.lane.b32.xlu0 %v170, 256
    %v173 = vpop.permute.xlu0 %172
    %s175 = sor.u32 256, 8
    %176 = vbcast.lane.b32.xlu0 %v170, %s175
    %v177 = vpop.permute.xlu0 %176
    %s179 = sor.u32 256, 16
    %180 = vbcast.lane.b32.xlu0 %v170, %s179
    %v181 = vpop.permute.xlu0 %180
    %s183 = sor.u32 256, 24
    %184 = vbcast.lane.b32.xlu0 %v170, %s183
    %v185 = vpop.permute.xlu0 %184
    %v186 = vlaneseq
    %v187 = vshrl.u32 %v186, 7
    %v188 = vsub.s32 6, %v187
    %v189 = vrot.slane %v21, %v188
    %191 = vbcast.lane.b32.xlu0 %v189, 256
    %v192 = vpop.permute.xlu0 %191
    %s194 = sor.u32 256, 8
    %195 = vbcast.lane.b32.xlu0 %v189, %s194
    %v196 = vpop.permute.xlu0 %195
    %s198 = sor.u32 256, 16
    %199 = vbcast.lane.b32.xlu0 %v189, %s198
    %v200 = vpop.permute.xlu0 %199
    %s202 = sor.u32 256, 24
    %203 = vbcast.lane.b32.xlu0 %v189, %s202
    %v204 = vpop.permute.xlu0 %203
    %v205 = vlaneseq
    %v206 = vshrl.u32 %v205, 7
    %v207 = vsub.s32 7, %v206
    %v208 = vrot.slane %v21, %v207
    %210 = vbcast.lane.b32.xlu0 %v208, 256
    %v211 = vpop.permute.xlu0 %210
    %s213 = sor.u32 256, 8
    %214 = vbcast.lane.b32.xlu0 %v208, %s213
    %v215 = vpop.permute.xlu0 %214
    %s217 = sor.u32 256, 16
    %218 = vbcast.lane.b32.xlu0 %v208, %s217
    %v219 = vpop.permute.xlu0 %218
    %s221 = sor.u32 256, 24
    %222 = vbcast.lane.b32.xlu0 %v208, %s221
    %v223 = vpop.permute.xlu0 %222
    %v224 = vlaneseq
    %v225 = vshrl.u32 %v224, 7
    %v226 = vsub.s32 0, %v225
    %v227 = vrot.slane %v46, %v226
    %v228 = vlaneseq
    %v229 = vshrl.u32 %v228, 7
    %v230 = vsub.s32 0, %v229
    %v231 = vrot.slane %v60, %v230
    %v232 = vlaneseq
    %v233 = vshrl.u32 %v232, 7
    %v234 = vsub.s32 0, %v233
    %v235 = vrot.slane %v68, %v234
    %v236 = vlaneseq
    %v237 = vshrl.u32 %v236, 7
    %v238 = vsub.s32 0, %v237
    %v239 = vrot.slane %v70, %v238
    %v240 = vlaneseq
    %v241 = vshrl.u32 %v240, 7
    %v242 = vsub.s32 0, %v241
    %v243 = vrot.slane %v53, %v242
    %v244 = vlaneseq
    %v245 = vshrl.u32 %v244, 7
    %v246 = vsub.s32 0, %v245
    %v247 = vrot.slane %v67, %v246
    %v248 = vlaneseq
    %v249 = vshrl.u32 %v248, 7
    %v250 = vsub.s32 0, %v249
    %v251 = vrot.slane %v69, %v250
    %v252 = vlaneseq
    %v253 = vshrl.u32 %v252, 7
    %v254 = vsub.s32 0, %v253
    %v255 = vrot.slane %v71, %v254
    %v264 = vsub.f32 %v227, %v78
    %v265 = vsub.f32 %v227, %v82
    %v266 = vsub.f32 %v227, %v86
    %v267 = vsub.f32 %v227, %v90
    %v268 = vsub.f32 %v231, %v97
    %v269 = vsub.f32 %v231, %v101
    %v270 = vsub.f32 %v231, %v105
    %v271 = vsub.f32 %v231, %v109
    %v272 = vsub.f32 %v235, %v116
    %v273 = vsub.f32 %v235, %v120
    %v274 = vsub.f32 %v235, %v124
    %v275 = vsub.f32 %v235, %v128
    %v276 = vsub.f32 %v239, %v135
    %v277 = vsub.f32 %v239, %v139
    %v278 = vsub.f32 %v239, %v143
    %v279 = vsub.f32 %v239, %v147
    %v280 = vsub.f32 %v243, %v154
    %v281 = vsub.f32 %v243, %v158
    %v282 = vsub.f32 %v243, %v162
    %v283 = vsub.f32 %v243, %v166
    %v284 = vsub.f32 %v247, %v173
    %v285 = vsub.f32 %v247, %v177
    %v286 = vsub.f32 %v247, %v181
    %v287 = vsub.f32 %v247, %v185
    %v288 = vsub.f32 %v251, %v192
    %v289 = vsub.f32 %v251, %v196
    %v290 = vsub.f32 %v251, %v200
    %v291 = vsub.f32 %v251, %v204
    %v292 = vsub.f32 %v255, %v211
    %v293 = vsub.f32 %v255, %v215
    %v294 = vsub.f32 %v255, %v219
    %v295 = vsub.f32 %v255, %v223
    %v296 = vmax.f32 %v264, 0.0
    %v297 = vmax.f32 %v265, 0.0
    %v298 = vmax.f32 %v266, 0.0
    %v299 = vmax.f32 %v267, 0.0
    %v300 = vmax.f32 %v268, 0.0
    %v301 = vmax.f32 %v269, 0.0
    %v302 = vmax.f32 %v270, 0.0
    %v303 = vmax.f32 %v271, 0.0
    %v304 = vmax.f32 %v272, 0.0
    %v305 = vmax.f32 %v273, 0.0
    %v306 = vmax.f32 %v274, 0.0
    %v307 = vmax.f32 %v275, 0.0
    %v308 = vmax.f32 %v276, 0.0
    %v309 = vmax.f32 %v277, 0.0
    %v310 = vmax.f32 %v278, 0.0
    %v311 = vmax.f32 %v279, 0.0
    %v312 = vmax.f32 %v280, 0.0
    %v313 = vmax.f32 %v281, 0.0
    %v314 = vmax.f32 %v282, 0.0
    %v315 = vmax.f32 %v283, 0.0
    %v316 = vmax.f32 %v284, 0.0
    %v317 = vmax.f32 %v285, 0.0
    %v318 = vmax.f32 %v286, 0.0
    %v319 = vmax.f32 %v287, 0.0
    %v320 = vmax.f32 %v288, 0.0
    %v321 = vmax.f32 %v289, 0.0
    %v322 = vmax.f32 %v290, 0.0
    %v323 = vmax.f32 %v291, 0.0
    %v324 = vmax.f32 %v292, 0.0
    %v325 = vmax.f32 %v293, 0.0
    %v326 = vmax.f32 %v294, 0.0
    %v327 = vmax.f32 %v295, 0.0
    %vm328 = vcmask 261120
    %v329 = vsel %vm328, %v296, 0.0
    %330 = vadd.xlane.f32.xlu0 %v329
    %v331 = vpop.xlane.xlu0 %330
    %v332 = vsel %vm328, %v297, 0.0
    %333 = vadd.xlane.f32.xlu0 %v332
    %v334 = vpop.xlane.xlu0 %333
    %v335 = vsel %vm328, %v298, 0.0
    %336 = vadd.xlane.f32.xlu0 %v335
    %v337 = vpop.xlane.xlu0 %336
    %v338 = vsel %vm328, %v299, 0.0
    %339 = vadd.xlane.f32.xlu0 %v338
    %v340 = vpop.xlane.xlu0 %339
    %v341 = vsel %vm328, %v300, 0.0
    %342 = vadd.xlane.f32.xlu0 %v341
    %v343 = vpop.xlane.xlu0 %342
    %v344 = vsel %vm328, %v301, 0.0
    %345 = vadd.xlane.f32.xlu0 %v344
    %v346 = vpop.xlane.xlu0 %345
    %v347 = vsel %vm328, %v302, 0.0
    %348 = vadd.xlane.f32.xlu0 %v347
    %v349 = vpop.xlane.xlu0 %348
    %v350 = vsel %vm328, %v303, 0.0
    %351 = vadd.xlane.f32.xlu0 %v350
    %v352 = vpop.xlane.xlu0 %351
    %v353 = vsel %vm328, %v304, 0.0
    %354 = vadd.xlane.f32.xlu0 %v353
    %v355 = vpop.xlane.xlu0 %354
    %v356 = vsel %vm328, %v305, 0.0
    %357 = vadd.xlane.f32.xlu0 %v356
    %v358 = vpop.xlane.xlu0 %357
    %v359 = vsel %vm328, %v306, 0.0
    %360 = vadd.xlane.f32.xlu0 %v359
    %v361 = vpop.xlane.xlu0 %360
    %v362 = vsel %vm328, %v307, 0.0
    %363 = vadd.xlane.f32.xlu0 %v362
    %v364 = vpop.xlane.xlu0 %363
    %v365 = vsel %vm328, %v308, 0.0
    %366 = vadd.xlane.f32.xlu0 %v365
    %v367 = vpop.xlane.xlu0 %366
    %v368 = vsel %vm328, %v309, 0.0
    %369 = vadd.xlane.f32.xlu0 %v368
    %v370 = vpop.xlane.xlu0 %369
    %v371 = vsel %vm328, %v310, 0.0
    %372 = vadd.xlane.f32.xlu0 %v371
    %v373 = vpop.xlane.xlu0 %372
    %v374 = vsel %vm328, %v311, 0.0
    %375 = vadd.xlane.f32.xlu0 %v374
    %v376 = vpop.xlane.xlu0 %375
    %v377 = vsel %vm328, %v312, 0.0
    %378 = vadd.xlane.f32.xlu0 %v377
    %v379 = vpop.xlane.xlu0 %378
    %v380 = vsel %vm328, %v313, 0.0
    %381 = vadd.xlane.f32.xlu0 %v380
    %v382 = vpop.xlane.xlu0 %381
    %v383 = vsel %vm328, %v314, 0.0
    %384 = vadd.xlane.f32.xlu0 %v383
    %v385 = vpop.xlane.xlu0 %384
    %v386 = vsel %vm328, %v315, 0.0
    %387 = vadd.xlane.f32.xlu0 %v386
    %v388 = vpop.xlane.xlu0 %387
    %v389 = vsel %vm328, %v316, 0.0
    %390 = vadd.xlane.f32.xlu0 %v389
    %v391 = vpop.xlane.xlu0 %390
    %v392 = vsel %vm328, %v317, 0.0
    %393 = vadd.xlane.f32.xlu0 %v392
    %v394 = vpop.xlane.xlu0 %393
    %v395 = vsel %vm328, %v318, 0.0
    %396 = vadd.xlane.f32.xlu0 %v395
    %v397 = vpop.xlane.xlu0 %396
    %v398 = vsel %vm328, %v319, 0.0
    %399 = vadd.xlane.f32.xlu0 %v398
    %v400 = vpop.xlane.xlu0 %399
    %v401 = vsel %vm328, %v320, 0.0
    %402 = vadd.xlane.f32.xlu0 %v401
    %v403 = vpop.xlane.xlu0 %402
    %v404 = vsel %vm328, %v321, 0.0
    %405 = vadd.xlane.f32.xlu0 %v404
    %v406 = vpop.xlane.xlu0 %405
    %v407 = vsel %vm328, %v322, 0.0
    %408 = vadd.xlane.f32.xlu0 %v407
    %v409 = vpop.xlane.xlu0 %408
    %v410 = vsel %vm328, %v323, 0.0
    %411 = vadd.xlane.f32.xlu0 %v410
    %v412 = vpop.xlane.xlu0 %411
    %v413 = vsel %vm328, %v324, 0.0
    %414 = vadd.xlane.f32.xlu0 %v413
    %v415 = vpop.xlane.xlu0 %414
    %v416 = vsel %vm328, %v325, 0.0
    %417 = vadd.xlane.f32.xlu0 %v416
    %v418 = vpop.xlane.xlu0 %417
    %v419 = vsel %vm328, %v326, 0.0
    %420 = vadd.xlane.f32.xlu0 %v419
    %v421 = vpop.xlane.xlu0 %420
    %v422 = vsel %vm328, %v327, 0.0
    %423 = vadd.xlane.f32.xlu0 %v422
    %v424 = vpop.xlane.xlu0 %423
    %vm425 = vcmp.lt.f32.partialorder %v331, 1.0
    %vm426 = vcmp.lt.f32.partialorder %v334, 1.0
    %vm427 = vcmp.lt.f32.partialorder %v337, 1.0
    %vm428 = vcmp.lt.f32.partialorder %v340, 1.0
    %vm429 = vcmp.lt.f32.partialorder %v343, 1.0
    %vm430 = vcmp.lt.f32.partialorder %v346, 1.0
    %vm431 = vcmp.lt.f32.partialorder %v349, 1.0
    %vm432 = vcmp.lt.f32.partialorder %v352, 1.0
    %vm433 = vcmp.lt.f32.partialorder %v355, 1.0
    %vm434 = vcmp.lt.f32.partialorder %v358, 1.0
    %vm435 = vcmp.lt.f32.partialorder %v361, 1.0
    %vm436 = vcmp.lt.f32.partialorder %v364, 1.0
    %vm437 = vcmp.lt.f32.partialorder %v367, 1.0
    %vm438 = vcmp.lt.f32.partialorder %v370, 1.0
    %vm439 = vcmp.lt.f32.partialorder %v373, 1.0
    %vm440 = vcmp.lt.f32.partialorder %v376, 1.0
    %vm441 = vcmp.lt.f32.partialorder %v379, 1.0
    %vm442 = vcmp.lt.f32.partialorder %v382, 1.0
    %vm443 = vcmp.lt.f32.partialorder %v385, 1.0
    %vm444 = vcmp.lt.f32.partialorder %v388, 1.0
    %vm445 = vcmp.lt.f32.partialorder %v391, 1.0
    %vm446 = vcmp.lt.f32.partialorder %v394, 1.0
    %vm447 = vcmp.lt.f32.partialorder %v397, 1.0
    %vm448 = vcmp.lt.f32.partialorder %v400, 1.0
    %vm449 = vcmp.lt.f32.partialorder %v403, 1.0
    %vm450 = vcmp.lt.f32.partialorder %v406, 1.0
    %vm451 = vcmp.lt.f32.partialorder %v409, 1.0
    %vm452 = vcmp.lt.f32.partialorder %v412, 1.0
    %vm453 = vcmp.lt.f32.partialorder %v415, 1.0
    %vm454 = vcmp.lt.f32.partialorder %v418, 1.0
    %vm455 = vcmp.lt.f32.partialorder %v421, 1.0
    %vm456 = vcmp.lt.f32.partialorder %v424, 1.0
    %v457 = vsel %vm425, 1, 0
    %v458 = vsel %vm426, 1, 0
    %v459 = vsel %vm427, 1, 0
    %v460 = vsel %vm428, 1, 0
    %v461 = vsel %vm429, 1, 0
    %v462 = vsel %vm430, 1, 0
    %v463 = vsel %vm431, 1, 0
    %v464 = vsel %vm432, 1, 0
    %v465 = vsel %vm433, 1, 0
    %v466 = vsel %vm434, 1, 0
    %v467 = vsel %vm435, 1, 0
    %v468 = vsel %vm436, 1, 0
    %v469 = vsel %vm437, 1, 0
    %v470 = vsel %vm438, 1, 0
    %v471 = vsel %vm439, 1, 0
    %v472 = vsel %vm440, 1, 0
    %v473 = vsel %vm441, 1, 0
    %v474 = vsel %vm442, 1, 0
    %v475 = vsel %vm443, 1, 0
    %v476 = vsel %vm444, 1, 0
    %v477 = vsel %vm445, 1, 0
    %v478 = vsel %vm446, 1, 0
    %v479 = vsel %vm447, 1, 0
    %v480 = vsel %vm448, 1, 0
    %v481 = vsel %vm449, 1, 0
    %v482 = vsel %vm450, 1, 0
    %v483 = vsel %vm451, 1, 0
    %v484 = vsel %vm452, 1, 0
    %v485 = vsel %vm453, 1, 0
    %v486 = vsel %vm454, 1, 0
    %v487 = vsel %vm455, 1, 0
    %v488 = vsel %vm456, 1, 0
    %v489 = vcvt.s32.f32 %v457
    %v490 = vcvt.s32.f32 %v458
    %v491 = vcvt.s32.f32 %v459
    %v492 = vcvt.s32.f32 %v460
    %v493 = vcvt.s32.f32 %v461
    %v494 = vcvt.s32.f32 %v462
    %v495 = vcvt.s32.f32 %v463
    %v496 = vcvt.s32.f32 %v464
    %v497 = vcvt.s32.f32 %v465
    %v498 = vcvt.s32.f32 %v466
    %v499 = vcvt.s32.f32 %v467
    %v500 = vcvt.s32.f32 %v468
    %v501 = vcvt.s32.f32 %v469
    %v502 = vcvt.s32.f32 %v470
    %v503 = vcvt.s32.f32 %v471
    %v504 = vcvt.s32.f32 %v472
    %v505 = vcvt.s32.f32 %v473
    %v506 = vcvt.s32.f32 %v474
    %v507 = vcvt.s32.f32 %v475
    %v508 = vcvt.s32.f32 %v476
    %v509 = vcvt.s32.f32 %v477
    %v510 = vcvt.s32.f32 %v478
    %v511 = vcvt.s32.f32 %v479
    %v512 = vcvt.s32.f32 %v480
    %v513 = vcvt.s32.f32 %v481
    %v514 = vcvt.s32.f32 %v482
    %v515 = vcvt.s32.f32 %v483
    %v516 = vcvt.s32.f32 %v484
    %v517 = vcvt.s32.f32 %v485
    %v518 = vcvt.s32.f32 %v486
    %v519 = vcvt.s32.f32 %v487
    %v520 = vcvt.s32.f32 %v488
    %v553 = vlaneseq
    %v554 = vand.u32 %v553, 127
    %v555 = vlaneseq
    %v556 = vshrl.u32 %v555, 7
    %v557 = vsub.s32 %v554, %v556
    %v558 = vrot.slane %v489, %v557
    %v559 = vadd.s32 %v554, 4294967288
    %v560 = vlaneseq
    %v561 = vshrl.u32 %v560, 7
    %v562 = vsub.s32 %v559, %v561
    %v563 = vrot.slane %v490, %v562
    %vm564 = vcmask 130112
    %v565 = vsel %vm564, %v563, %v558
    %v566 = vadd.s32 %v554, 4294967280
    %v567 = vlaneseq
    %v568 = vshrl.u32 %v567, 7
    %v569 = vsub.s32 %v566, %v568
    %v570 = vrot.slane %v491, %v569
    %vm571 = vcmask 195712
    %v572 = vsel %vm571, %v570, %v565
    %v573 = vadd.s32 %v554, 4294967272
    %v574 = vlaneseq
    %v575 = vshrl.u32 %v574, 7
    %v576 = vsub.s32 %v573, %v575
    %v577 = vrot.slane %v492, %v576
    %vm578 = vcmask 261312
    %v579 = vsel %vm578, %v577, %v572
    %v580 = vlaneseq
    %v581 = vshrl.u32 %v580, 7
    %v582 = vsub.s32 %v554, %v581
    %v583 = vrot.slane %v493, %v582
    %v584 = vlaneseq
    %v585 = vshrl.u32 %v584, 7
    %v586 = vsub.s32 %v559, %v585
    %v587 = vrot.slane %v494, %v586
    %v588 = vsel %vm564, %v587, %v583
    %v589 = vlaneseq
    %v590 = vshrl.u32 %v589, 7
    %v591 = vsub.s32 %v566, %v590
    %v592 = vrot.slane %v495, %v591
    %v593 = vsel %vm571, %v592, %v588
    %v594 = vlaneseq
    %v595 = vshrl.u32 %v594, 7
    %v596 = vsub.s32 %v573, %v595
    %v597 = vrot.slane %v496, %v596
    %v598 = vsel %vm578, %v597, %v593
    %v599 = vlaneseq
    %v600 = vshrl.u32 %v599, 7
    %v601 = vsub.s32 %v554, %v600
    %v602 = vrot.slane %v497, %v601
    %v603 = vlaneseq
    %v604 = vshrl.u32 %v603, 7
    %v605 = vsub.s32 %v559, %v604
    %v606 = vrot.slane %v498, %v605
    %v607 = vsel %vm564, %v606, %v602
    %v608 = vlaneseq
    %v609 = vshrl.u32 %v608, 7
    %v610 = vsub.s32 %v566, %v609
    %v611 = vrot.slane %v499, %v610
    %v612 = vsel %vm571, %v611, %v607
    %v613 = vlaneseq
    %v614 = vshrl.u32 %v613, 7
    %v615 = vsub.s32 %v573, %v614
    %v616 = vrot.slane %v500, %v615
    %v617 = vsel %vm578, %v616, %v612
    %v618 = vlaneseq
    %v619 = vshrl.u32 %v618, 7
    %v620 = vsub.s32 %v554, %v619
    %v621 = vrot.slane %v501, %v620
    %v622 = vlaneseq
    %v623 = vshrl.u32 %v622, 7
    %v624 = vsub.s32 %v559, %v623
    %v625 = vrot.slane %v502, %v624
    %v626 = vsel %vm564, %v625, %v621
    %v627 = vlaneseq
    %v628 = vshrl.u32 %v627, 7
    %v629 = vsub.s32 %v566, %v628
    %v630 = vrot.slane %v503, %v629
    %v631 = vsel %vm571, %v630, %v626
    %v632 = vlaneseq
    %v633 = vshrl.u32 %v632, 7
    %v634 = vsub.s32 %v573, %v633
    %v635 = vrot.slane %v504, %v634
    %v636 = vsel %vm578, %v635, %v631
    %v637 = vlaneseq
    %v638 = vshrl.u32 %v637, 7
    %v639 = vsub.s32 %v554, %v638
    %v640 = vrot.slane %v505, %v639
    %v641 = vlaneseq
    %v642 = vshrl.u32 %v641, 7
    %v643 = vsub.s32 %v559, %v642
    %v644 = vrot.slane %v506, %v643
    %v645 = vsel %vm564, %v644, %v640
    %v646 = vlaneseq
    %v647 = vshrl.u32 %v646, 7
    %v648 = vsub.s32 %v566, %v647
    %v649 = vrot.slane %v507, %v648
    %v650 = vsel %vm571, %v649, %v645
    %v651 = vlaneseq
    %v652 = vshrl.u32 %v651, 7
    %v653 = vsub.s32 %v573, %v652
    %v654 = vrot.slane %v508, %v653
    %v655 = vsel %vm578, %v654, %v650
    %v656 = vlaneseq
    %v657 = vshrl.u32 %v656, 7
    %v658 = vsub.s32 %v554, %v657
    %v659 = vrot.slane %v509, %v658
    %v660 = vlaneseq
    %v661 = vshrl.u32 %v660, 7
    %v662 = vsub.s32 %v559, %v661
    %v663 = vrot.slane %v510, %v662
    %v664 = vsel %vm564, %v663, %v659
    %v665 = vlaneseq
    %v666 = vshrl.u32 %v665, 7
    %v667 = vsub.s32 %v566, %v666
    %v668 = vrot.slane %v511, %v667
    %v669 = vsel %vm571, %v668, %v664
    %v670 = vlaneseq
    %v671 = vshrl.u32 %v670, 7
    %v672 = vsub.s32 %v573, %v671
    %v673 = vrot.slane %v512, %v672
    %v674 = vsel %vm578, %v673, %v669
    %v675 = vlaneseq
    %v676 = vshrl.u32 %v675, 7
    %v677 = vsub.s32 %v554, %v676
    %v678 = vrot.slane %v513, %v677
    %v679 = vlaneseq
    %v680 = vshrl.u32 %v679, 7
    %v681 = vsub.s32 %v559, %v680
    %v682 = vrot.slane %v514, %v681
    %v683 = vsel %vm564, %v682, %v678
    %v684 = vlaneseq
    %v685 = vshrl.u32 %v684, 7
    %v686 = vsub.s32 %v566, %v685
    %v687 = vrot.slane %v515, %v686
    %v688 = vsel %vm571, %v687, %v683
    %v689 = vlaneseq
    %v690 = vshrl.u32 %v689, 7
    %v691 = vsub.s32 %v573, %v690
    %v692 = vrot.slane %v516, %v691
    %v693 = vsel %vm578, %v692, %v688
    %v694 = vlaneseq
    %v695 = vshrl.u32 %v694, 7
    %v696 = vsub.s32 %v554, %v695
    %v697 = vrot.slane %v517, %v696
    %v698 = vlaneseq
    %v699 = vshrl.u32 %v698, 7
    %v700 = vsub.s32 %v559, %v699
    %v701 = vrot.slane %v518, %v700
    %v702 = vsel %vm564, %v701, %v697
    %v703 = vlaneseq
    %v704 = vshrl.u32 %v703, 7
    %v705 = vsub.s32 %v566, %v704
    %v706 = vrot.slane %v519, %v705
    %v707 = vsel %vm571, %v706, %v702
    %v708 = vlaneseq
    %v709 = vshrl.u32 %v708, 7
    %v710 = vsub.s32 %v573, %v709
    %v711 = vrot.slane %v520, %v710
    %v712 = vsel %vm578, %v711, %v707
    %vm713 = vcmask 1041409
    %v714 = vsel %vm713, %v598, %v579
    %vm715 = vcmask 1042434
    %v716 = vsel %vm715, %v617, %v714
    %vm717 = vcmask 1043459
    %v718 = vsel %vm717, %v636, %v716
    %vm719 = vcmask 1044484
    %v720 = vsel %vm719, %v655, %v718
    %vm721 = vcmask 1045509
    %v722 = vsel %vm721, %v674, %v720
    %vm723 = vcmask 1046534
    %v724 = vsel %vm723, %v693, %v722
    %vm725 = vcmask 1047559
    %v726 = vsel %vm725, %v712, %v724
    %v728 = vsel %vm328, %v726, 0.0
    %729 = vadd.xlane.f32.xlu0 %v728
    %v730 = vpop.xlane.xlu0 %729
    %v731 = vmul.f32 %v21, %v726
    %v732 = vsel %vm328, %v731, 0.0
    %733 = vadd.xlane.f32.xlu0 %v732
    %v734 = vpop.xlane.xlu0 %733
    %v735 = vsub.f32 %v734, 1.0
    %v736 = vrcp.pop %v730
    %v737 = vmul.f32 %v735, %v736
    %v738 = vsub.f32 %v21, %v737
    %v739 = vmax.f32 %v738, 0.0
    %740 = vst.msk [vmem:[#allocation5] sm:$0xff] %vm328, %v739
    // Predicated region
    $region10: #{tpu_custom_call.1} parent=1 // pred_check
      _
    $region11: #{tpu_custom_call.1} parent=1 // pred_check_branch
      %742 = sbr.rel (0) target = $region13
    $region12: #{tpu_custom_call.1} parent=1 // pred_region
      %s744 = ssub.s32 128, 128
      %745 = vsyncadd [#allocation4], %s744
      %s747 = sshll.u32 [#allocation5], 4
      %s748 = int_to_ptr.vmem [resolvable:$true] %s747
      %750 = dma.vmem_to_hbm [thread:$0]  %s748, 128, %s1, [#allocation4]
    $region13: #{tpu_custom_call.1} parent=1 // pred_fallthru
      _
    // Predicated region
    $region14: #{tpu_custom_call.1} parent=1 // pred_check
      _
    $region15: #{tpu_custom_call.1} parent=1 // pred_check_branch
      %752 = sbr.rel (0) target = $region17
    $region16: #{tpu_custom_call.1} parent=1 // pred_region
      %753 = dma.done [#allocation4], 128
    $region17: #{tpu_custom_call.1} parent=1 // pred_fallthru
      _
    %754 = vsyncpa [#allocation3], 1
    %755 = vsyncpa [#allocation4], 1

</llo_original>
